<compile_context>
chip_gen: v5e
topology: v5e:2x2
jax: 0.10.0
libtpu: 0.0.40
codegen_flags: <defaults>
</compile_context>

<pallas_src>
import jax
import jax.numpy as jnp
from jax.experimental import pallas as pl
from jax.experimental.pallas import tpu as pltpu


# Default tile sizes (f32): in tile (TB, TS) = 2 MiB, out tile (2, TB, TS) = 4 MiB,
# ~12 MiB double-buffered -> fits half of every generation's physical VMEM.
_TB_MAX = 512
_TS_MAX = 1024

# Below this output size the Pallas launch / per-step overhead dominates moving the data.
_PALLAS_MIN_OUT_BYTES = 1 << 20


def _round_up(x, m):
    return (x + m - 1) // m * m


def _vmem_capacity_bytes():
    """Physical VMEM per core; conservative 128 MiB (v5e/v6e) if the query fails."""
    try:
        return int(pltpu.get_tpu_info().vmem_capacity_bytes)
    except Exception:
        return 128 << 20


def band_encoding_kernel(spectra_ref, band_ref, out_ref):
    """spectra_ref: (TB, TS); band_ref: (1, TS); out_ref: (2, TB, TS)."""
    spec = spectra_ref[...]
    out_ref[0] = spec                                        # channel 0: reflectance
    # Channel 1: band wavelength, sublane-broadcast across the batch tile.
    out_ref[1] = jnp.broadcast_to(band_ref[...], spec.shape)


def band_encoding(spectra, banddef, *, channel_major=False, out_dtype=jnp.float32,
                  force_pallas=False, tb=_TB_MAX, ts=_TS_MAX):
    """BandEncoding forward.

    spectra: (b, s) or (b, s, 1); banddef: (s,) or (s, 1), already standardized.
    Returns (b, s, 2) in `out_dtype` (PyTorch parity) or, with channel_major=True,
    the kernel's native lane-dense (2, b, s) slab (no extra transpose pass).
    out_dtype=jnp.bfloat16 halves HBM traffic for this purely bandwidth-bound op.
    """
    if spectra.ndim == 3:
        spectra = spectra[..., 0]
    b, s = spectra.shape
    spectra = spectra.astype(out_dtype)
    band = banddef.astype(out_dtype).reshape(1, s)
    itemsize = jnp.dtype(out_dtype).itemsize

    out_bytes = 2 * b * s * itemsize
    if not force_pallas and out_bytes < _PALLAS_MIN_OUT_BYTES:
        # Small-shape fallback: per-call overhead would dwarf a ~KiB copy.
        band_b = jnp.broadcast_to(band, (b, s))
        if channel_major:
            return jnp.stack([spectra, band_b], axis=0)
        return jnp.stack([spectra, band_b], axis=-1)

    # ---- tiling ----------------------------------------------------------
    # Block last two dims must be multiples of (8, 128) or equal the full array dims.
    # Small axes use the full dim (ragged sizes OK); large axes use aligned tiles and
    # ragged edge blocks are clipped by the Pallas pipeline (no wrapper pad/slice).
    tb_eff = b if b <= tb else _round_up(tb, 8)
    ts_eff = s if s <= ts else _round_up(ts, 128)

    def _tile_bytes(tbv, tsv):
        # spectra tile + banddef tile + (2, tb, ts) output tile
        return itemsize * (tbv * tsv + tsv + 2 * tbv * tsv)

    # Generation-aware VMEM budget: never ask for more than ~half physical VMEM
    # (v7x only has 64 MiB total). Shrink caller-supplied tiles if needed.
    budget = min(_vmem_capacity_bytes() // 2, 64 << 20)
    while 2 * _tile_bytes(tb_eff, ts_eff) + (2 << 20) > budget:
        if tb_eff != b and tb_eff > 8 and tb_eff % 16 == 0:
            tb_eff //= 2
        elif ts_eff != s and ts_eff > 128 and ts_eff % 256 == 0:
            ts_eff //= 2
        else:
            break

    need = 2 * _tile_bytes(tb_eff, ts_eff)          # double-buffered working set
    vmem_limit = int(min(budget, max(need + need // 2, 16 << 20)))
    vmem_limit = max(vmem_limit, need + (1 << 20))  # never below what the tiles need

    # Inner (fastest-varying) grid axis is the batch-tile axis, so the banddef block
    # index (0, sj) is constant along it and its DMA is not re-issued every step.
    grid = (pl.cdiv(s, ts_eff), pl.cdiv(b, tb_eff))

    slab = pl.pallas_call(
        band_encoding_kernel,
        out_shape=jax.ShapeDtypeStruct((2, b, s), out_dtype),
        grid=grid,
        in_specs=[
            pl.BlockSpec((tb_eff, ts_eff), lambda sj, bi: (bi, sj)),
            pl.BlockSpec((1, ts_eff), lambda sj, bi: (0, sj)),
        ],
        out_specs=pl.BlockSpec((2, tb_eff, ts_eff), lambda sj, bi: (0, bi, sj)),
        compiler_params=pltpu.CompilerParams(
            # "parallel" on both axes is the documented megacore mechanism; on
            # multi-TensorCore chips each TC streams a disjoint set of tiles.
            dimension_semantics=("parallel", "parallel"),
            vmem_limit_bytes=vmem_limit,
        ),
    )(spectra, band)

    if channel_major:
        return slab
    # PyTorch parity: (b, s, 2). One XLA transpose (see TODO at the top); prefer
    # channel_major=True or fusing into the downstream Linear(2, d) for bandwidth.
    return jnp.transpose(slab, (1, 2, 0))


def make_banddef(s):
    """Deterministic synthetic band wavelengths, standardized like the module.

    PyTorch: (banddef - mean) / std  with torch.std (unbiased, ddof=1).
    """
    raw = jnp.linspace(400.0, 2500.0, s, dtype=jnp.float32)  # stands in for banddef.npy
    mean = jnp.mean(raw)
    std = jnp.std(raw, ddof=1)
    return (raw - mean) / std


if __name__ == "__main__":
    key = jax.random.PRNGKey(0)

    def reference(spectra3, banddef):
        b, s, _ = spectra3.shape
        band = jnp.broadcast_to(banddef.reshape(1, s, 1), spectra3.shape)
        return jnp.concatenate([spectra3, band], axis=-1)

    # Aligned single block; ragged full-dim blocks; larger full-dim blocks.
    for idx, (b, s) in enumerate([(8, 256), (5, 200), (16, 1000)]):
        k = jax.random.fold_in(key, idx)
        spectra = jax.random.uniform(k, (b, s, 1), dtype=jnp.float32)
        banddef = make_banddef(s)
        ref = reference(spectra, banddef)

        enc = jax.block_until_ready(band_encoding(spectra, banddef, force_pallas=True))
        assert enc.shape == (b, s, 2), enc.shape
        assert enc.dtype == jnp.float32
        assert jnp.array_equal(enc, ref), f"mismatch (b={b}, s={s})"

        # Fusion-friendly channel-major slab (no transpose pass).
        slab = jax.block_until_ready(
            band_encoding(spectra, banddef, force_pallas=True, channel_major=True))
        assert slab.shape == (2, b, s), slab.shape
        assert jnp.array_equal(jnp.transpose(slab, (1, 2, 0)), ref)

    # Multi-block ragged grid with NO wrapper padding/slicing: small forced tiles so
    # both grid axes have ragged edge blocks, clipped by the Pallas pipeline.
    b, s = 20, 300
    spectra = jax.random.uniform(jax.random.fold_in(key, 7), (b, s, 1), dtype=jnp.float32)
    banddef = make_banddef(s)
    enc = jax.block_until_ready(
        band_encoding(spectra, banddef, force_pallas=True, tb=8, ts=128))
    assert enc.shape == (b, s, 2)
    assert jnp.array_equal(enc, reference(spectra, banddef)), "ragged multi-block mismatch"

    # bf16 output option (halves HBM bytes; pure cast+copy, exact vs bf16-cast reference).
    b, s = 16, 256
    spectra = jax.random.uniform(jax.random.fold_in(key, 11), (b, s, 1), dtype=jnp.float32)
    banddef = make_banddef(s)
    slab16 = jax.block_until_ready(
        band_encoding(spectra, banddef, force_pallas=True, channel_major=True,
                      out_dtype=jnp.bfloat16))
    ref16 = jnp.stack(
        [spectra[..., 0].astype(jnp.bfloat16),
         jnp.broadcast_to(banddef.astype(jnp.bfloat16).reshape(1, s), (b, s))], axis=0)
    assert slab16.dtype == jnp.bfloat16
    assert jnp.array_equal(slab16, ref16), "bf16 mismatch"

    # Tiny-shape path: auto-falls back to plain XLA (launch overhead dominates).
    spectra = jax.random.uniform(key, (2, 16, 1), dtype=jnp.float32)
    banddef = make_banddef(16)
    enc = jax.block_until_ready(band_encoding(spectra, banddef))
    assert jnp.array_equal(enc, reference(spectra, banddef))

    print("KERNEL_OK")
</pallas_src>

<mosaic_0001>
module attributes {stable_mosaic.version = 11 : i64} {
  func.func @band_encoding_kernel(%arg0: i32, %arg1: i32, %arg2: memref<8x256xf32, #tpu.memory_space<vmem>>, %arg3: memref<1x256xf32, #tpu.memory_space<vmem>>, %arg4: memref<2x8x256xf32, #tpu.memory_space<vmem>>) attributes {dimension_semantics = [#tpu.dimension_semantics<parallel>, #tpu.dimension_semantics<parallel>], iteration_bounds = array<i64: 1, 1>, scalar_prefetch = 0 : i64, scratch_operands = 0 : i64, tpu.core_type = #tpu.core_type<tc>, window_params = [{transform_indices = @transform_0, window_bounds = array<i64: 8, 256>}, {transform_indices = @transform_1, window_bounds = array<i64: 1, 256>}, {transform_indices = @transform_2, window_bounds = array<i64: 2, 8, 256>}]} {
    %c0 = arith.constant 0 : index
    %c0_0 = arith.constant 0 : index
    %0 = vector.load %arg2[%c0, %c0_0] : memref<8x256xf32, #tpu.memory_space<vmem>>, vector<8x256xf32>
    %c0_1 = arith.constant 0 : index
    %c0_2 = arith.constant 0 : index
    %c0_3 = arith.constant 0 : index
    %1 = vector.load %arg4[%c0_1, %c0_2, %c0_3] : memref<2x8x256xf32, #tpu.memory_space<vmem>>, vector<1x8x256xf32>
    %2 = vector.shape_cast %1 : vector<1x8x256xf32> to vector<8x256xf32>
    %3 = vector.shape_cast %0 : vector<8x256xf32> to vector<1x8x256xf32>
    tpu.vector_store %arg4[%c0_1, %c0_2, %c0_3], %3 {strides = array<i32>} : memref<2x8x256xf32, #tpu.memory_space<vmem>>, vector<1x8x256xf32>,
    %c0_4 = arith.constant 0 : index
    %c0_5 = arith.constant 0 : index
    %4 = vector.load %arg3[%c0_4, %c0_5] : memref<1x256xf32, #tpu.memory_space<vmem>>, vector<1x256xf32>
    %5 = vector.shape_cast %4 : vector<1x256xf32> to vector<1x256xf32>
    %6 = vector.broadcast %5 : vector<1x256xf32> to vector<8x256xf32>
    %c1 = arith.constant 1 : index
    %c0_6 = arith.constant 0 : index
    %c0_7 = arith.constant 0 : index
    %7 = vector.load %arg4[%c1, %c0_6, %c0_7] : memref<2x8x256xf32, #tpu.memory_space<vmem>>, vector<1x8x256xf32>
    %8 = vector.shape_cast %7 : vector<1x8x256xf32> to vector<8x256xf32>
    %9 = vector.shape_cast %6 : vector<8x256xf32> to vector<1x8x256xf32>
    tpu.vector_store %arg4[%c1, %c0_6, %c0_7], %9 {strides = array<i32>} : memref<2x8x256xf32, #tpu.memory_space<vmem>>, vector<1x8x256xf32>,
    return
  }
  func.func @transform_0(%arg0: i32, %arg1: i32) -> (i32, i32) {
    %c0_i32 = arith.constant 0 : i32
    return %arg1, %arg0 : i32, i32
  }
  func.func @transform_1(%arg0: i32, %arg1: i32) -> (i32, i32) {
    %c0_i32 = arith.constant 0 : i32
    %c0_i32_0 = arith.constant 0 : i32
    return %c0_i32, %arg0 : i32, i32
  }
  func.func @transform_2(%arg0: i32, %arg1: i32) -> (i32, i32, i32) {
    %c0_i32 = arith.constant 0 : i32
    %c0_i32_0 = arith.constant 0 : i32
    return %c0_i32, %arg1, %arg0 : i32, i32, i32
  }
}

</mosaic_0001>

<llo_original>
// kernel: tpu_custom_call.1
$region0: #{tpu_custom_call.1}
  #allocation0 [shape = 'u32[]', space=smem, size = 0x4, offset = 0x4, fixed_abs, tag = 'smem constant byte address 0x4 - core index']
  #allocation1 [shape = 'u32[72,128]{1,0:T(1,128)}', space=vmem, size = 0x9000, scoped, tag = 'internal scratch']
  %s0 = inlined_call_operand.hbm [shape: f32[8,256], index: 0, kind: input, shape index: {}]
  %s1 = inlined_call_operand.hbm [shape: f32[1,256], index: 1, kind: input, shape index: {}]
  %s2 = inlined_call_operand.hbm [shape: f32[2,8,256], index: 2, kind: output, shape index: {}]
  %s3 = sld [smem:[#allocation0]]
  $region26: #{tpu_custom_call.1} parent=0
    _
  %s5 = ssub.s32 1, %s3
  %s6 = scalar_select 0, %s5, %s3
  $region1: #{tpu_custom_call.1} parent=0
    #allocation2 [shape = 'u8[8192]{0}', space=vmem, size = 0x2000, scoped, tag = 'input window, operand 0, single buffered']
    #allocation3 [shape = 's32[1]{0}', space=sflag, size = 0x4, scoped, tag = 'scoped memory for tpu_custom_call.1']
    #allocation4 [shape = 's32[1]{0}', space=sflag, size = 0x4, scoped, tag = 'scoped memory for tpu_custom_call.1']
    #allocation5 [shape = 'u8[1024]{0}', space=vmem, size = 0x400, scoped, tag = 'input window, operand 1, single buffered']
    #allocation6 [shape = 's32[1]{0}', space=sflag, size = 0x4, scoped, tag = 'scoped memory for tpu_custom_call.1']
    #allocation7 [shape = 'u8[16384]{0}', space=vmem, size = 0x4000, scoped, tag = 'output window, operand 0, single buffered']
    %7 = vsyncpa [#allocation3], 0
    %8 = vsyncpa [#allocation6], 0
    %9 = vsyncpa [#allocation4], 0
    // Predicated region
    $region2: #{tpu_custom_call.1} parent=1 // pred_check
      _
    $region3: #{tpu_custom_call.1} parent=1 // pred_check_branch
      %11 = sbr.rel (0) target = $region5
    $region4: #{tpu_custom_call.1} parent=1 // pred_region
      %13 = vsyncadd [#allocation3], 0
      %s15 = sshll.u32 %s0, 4
      %s16 = int_to_ptr.hbm [resolvable:$true] %s15
      %s17 = sshll.u32 [#allocation2], 4
      %s18 = int_to_ptr.vmem [resolvable:$true] %s17
      %20 = dma.hbm_to_vmem [thread:$0]  %s16, 256, %s18, [#allocation3]
    $region5: #{tpu_custom_call.1} parent=1 // pred_fallthru
      _
    // Predicated region
    $region6: #{tpu_custom_call.1} parent=1 // pred_check
      _
    $region7: #{tpu_custom_call.1} parent=1 // pred_check_branch
      %22 = sbr.rel (0) target = $region9
    $region8: #{tpu_custom_call.1} parent=1 // pred_region
      %24 = vsyncadd [#allocation6], 0
      %s26 = sshll.u32 %s1, 4
      %s27 = int_to_ptr.hbm [resolvable:$true] %s26
      %s28 = sshll.u32 [#allocation5], 4
      %s29 = int_to_ptr.vmem [resolvable:$true] %s28
      %31 = dma.hbm_to_vmem [thread:$0]  %s27, 32, %s29, [#allocation6]
    $region9: #{tpu_custom_call.1} parent=1 // pred_fallthru
      _
    // Predicated region
    $region10: #{tpu_custom_call.1} parent=1 // pred_check
      _
    $region11: #{tpu_custom_call.1} parent=1 // pred_check_branch
      %33 = sbr.rel (0) target = $region13
    $region12: #{tpu_custom_call.1} parent=1 // pred_region
      %35 = dma.done [#allocation3], 256
    $region13: #{tpu_custom_call.1} parent=1 // pred_fallthru
      _
    // Predicated region
    $region14: #{tpu_custom_call.1} parent=1 // pred_check
      _
    $region15: #{tpu_custom_call.1} parent=1 // pred_check_branch
      %37 = sbr.rel (0) target = $region17
    $region16: #{tpu_custom_call.1} parent=1 // pred_region
      %39 = dma.done [#allocation6], 32
    $region17: #{tpu_custom_call.1} parent=1 // pred_fallthru
      _
    %v40 = vld [vmem:[#allocation2] sm:$0xff]
    %v41 = vld [vmem:[#allocation2 + $0x8] sm:$0xff]
    %42 = vst [vmem:[#allocation7] sm:$0xff] %v40
    %43 = vst [vmem:[#allocation7 + $0x8] sm:$0xff] %v41
    %v44 = vld [vmem:[#allocation5] sm:$0x3]
    %v46 = vperm.slane %v44, 0
    %v47 = vperm.slane %v44, 1
    %s50 = scalar_lea.vmem [#allocation7], 16
    %51 = vst [vmem:[%s50] sm:$0xff] %v46
    %52 = vst [vmem:[%s50 + $0x8] sm:$0xff] %v47
    // Predicated region
    $region18: #{tpu_custom_call.1} parent=1 // pred_check
      _
    $region19: #{tpu_custom_call.1} parent=1 // pred_check_branch
      %54 = sbr.rel (0) target = $region21
    $region20: #{tpu_custom_call.1} parent=1 // pred_region
      %56 = vsyncadd [#allocation4], 0
      %s57 = sshll.u32 [#allocation7], 4
      %s58 = int_to_ptr.vmem [resolvable:$true] %s57
      %s59 = sshll.u32 %s2, 4
      %s60 = int_to_ptr.hbm [resolvable:$true] %s59
      %65 = dma.vmem_to_hbm [thread:$0]  %s58, 512, %s60, [#allocation4], 256, 256, 16
    $region21: #{tpu_custom_call.1} parent=1 // pred_fallthru
      _
    // Predicated region
    $region22: #{tpu_custom_call.1} parent=1 // pred_check
      _
    $region23: #{tpu_custom_call.1} parent=1 // pred_check_branch
      %67 = sbr.rel (0) target = $region25
    $region24: #{tpu_custom_call.1} parent=1 // pred_region
      %69 = dma.done [#allocation4], 512
    $region25: #{tpu_custom_call.1} parent=1 // pred_fallthru
      _
    %70 = vsyncpa [#allocation3], 1
    %71 = vsyncpa [#allocation6], 1
    %72 = vsyncpa [#allocation4], 1

</llo_original>
